<compile_context>
chip_gen: v7x
topology: tpu7x:2x2x1
jax: 0.10.0
libtpu: 0.0.40
codegen_flags: <defaults>
</compile_context>

<pallas_src>
import functools

import jax
import jax.numpy as jnp
from jax.experimental import pallas as pl
from jax.experimental.pallas import tpu as pltpu


_PAD_SENTINEL = -3.0e38  # per-pixel CE loss is always >= 0, any negative works


def _round_up(x, m):
    return (x + m - 1) // m * m


def _ce_loss_kernel(logits_ref, target_ref, loss_ref, *, hw, needs_mask):
    """Per-pixel -log_softmax(logits)[target] for one (1, C, TS, 128) tile."""
    C = logits_ref.shape[1]
    TS = loss_ref.shape[2]

    # Targets arrive as int8 (or int32); widen once into 32-bit layout for the
    # channel-id compares below.
    t = target_ref[...].astype(jnp.int32)                      # (1, 1, TS, 128)

    def ch(c):
        # Static ref slice: re-read from VMEM each use (vld has slack) instead
        # of holding all C channel tiles live in vregs.
        return logits_ref[:, c:c + 1, :, :].astype(jnp.float32)

    # Pass 1: running channel max (VPU).
    m = ch(0)
    for c in range(1, C):
        m = jnp.maximum(m, ch(c))

    # Pass 2: exp-sum (EUP) + target-logit select (VPU), re-reading logits.
    se = jnp.zeros_like(m)
    zt = jnp.zeros_like(m)
    for c in range(C):
        z = ch(c) - m
        se = se + jnp.exp(z)
        zt = jnp.where(t == c, z, zt)

    # loss = logsumexp(x - m) - (x_t - m) = -log_softmax(x)[t]
    loss = jnp.log(se) - zt

    if needs_mask:
        # Sentinel-mask padded pixels so they can never enter the top-k.
        row = jax.lax.broadcasted_iota(jnp.int32, (1, 1, TS, 128), 2)
        col = jax.lax.broadcasted_iota(jnp.int32, (1, 1, TS, 128), 3)
        pix = (pl.program_id(1) * TS + row) * 128 + col
        loss = jnp.where(pix < hw, loss, _PAD_SENTINEL)

    loss_ref[...] = loss
    # TODO(synk): for bf16 logits on v6e/v7x keep pass 1 in bf16 (bf16 VALU)
    # and only widen for the exp/log pass; v5e has no bf16 VALU/EUP.


def per_pixel_ce_loss(logits_nc_hw, target_n_hw, *,
                      max_rows_per_tile=512,
                      vmem_tile_budget_bytes=12 * 1024 * 1024):
    """Per-pixel cross-entropy.

    logits_nc_hw: (N, C, HW) float ; target_n_hw: (N, HW) int.
    Returns (N, HW_pad) float32; padded pixels (index >= HW) carry _PAD_SENTINEL.
    """
    N, C, HW = logits_nc_hw.shape

    logit_bytes = jnp.dtype(logits_nc_hw.dtype).itemsize
    tgt_dtype = jnp.int8 if C <= 127 else jnp.int32
    tgt_bytes = jnp.dtype(tgt_dtype).itemsize

    # Rows of 128 lanes per pixel tile, sized against a VMEM byte budget so the
    # double-buffered working set fits comfortably even on the 64 MiB v7x part.
    bytes_per_row = (C * logit_bytes + tgt_bytes + 4) * 128
    budget_rows = vmem_tile_budget_bytes // (2 * bytes_per_row)
    max_rows = max(32, (min(max_rows_per_tile, budget_rows) // 32) * 32)

    R = pl.cdiv(HW, 128)
    nt = pl.cdiv(R, max_rows)
    TS = _round_up(pl.cdiv(R, nt), 32)   # 32: sublane multiple for int8 targets
    nt = pl.cdiv(R, TS)
    if N * nt < 2 and R > 32:
        # Keep at least 2 parallel grid steps so both v7x TensorCores work.
        TS = _round_up(pl.cdiv(R, 2), 32)
        nt = pl.cdiv(R, TS)
    R_pad = nt * TS
    HW_pad = R_pad * 128

    if HW_pad != HW:
        logits_nc_hw = jnp.pad(logits_nc_hw, ((0, 0), (0, 0), (0, HW_pad - HW)))
        target_n_hw = jnp.pad(target_n_hw, ((0, 0), (0, HW_pad - HW)))

    x4 = logits_nc_hw.reshape(N, C, R_pad, 128)                       # free reshape
    t4 = target_n_hw.astype(tgt_dtype).reshape(N, 1, R_pad, 128)      # lane-dense int8

    kernel = functools.partial(_ce_loss_kernel, hw=HW, needs_mask=(HW_pad != HW))

    loss4 = pl.pallas_call(
        kernel,
        out_shape=jax.ShapeDtypeStruct((N, 1, R_pad, 128), jnp.float32),
        grid_spec=pltpu.PrefetchScalarGridSpec(
            num_scalar_prefetch=0,
            grid=(N, nt),
            in_specs=[
                pl.BlockSpec((1, C, TS, 128), lambda n, p: (n, 0, p, 0)),  # logits
                pl.BlockSpec((1, 1, TS, 128), lambda n, p: (n, 0, p, 0)),  # targets
            ],
            out_specs=pl.BlockSpec((1, 1, TS, 128), lambda n, p: (n, 0, p, 0)),
        ),
        compiler_params=pltpu.CompilerParams(
            dimension_semantics=("parallel", "parallel"),
            vmem_limit_bytes=32 * 1024 * 1024,
        ),
    )(x4, t4)

    return loss4.reshape(N, HW_pad)


def bce_topk_loss(logits_nchw, target_nhw, k=10):
    N, C, H, W = logits_nchw.shape
    x = logits_nchw.reshape(N, C, H * W)        # free, contiguous - no transpose
    t = target_nhw.reshape(N, H * W)

    # Padded pixels hold a large-negative sentinel, so the padded loss goes
    # straight into top_k (no extra HBM slice pass over the loss array).
    loss_padded = per_pixel_ce_loss(x, t).reshape(-1)

    num_voxels = N * H * W
    k_count = max(1, min(num_voxels, int(num_voxels * k / 100)))  # clamp tiny inputs
    # TODO(synk): for multi-megapixel inputs replace the full-sort lax.top_k with
    # a fused two-pass histogram/threshold selection (the O(M log M) sort
    # dominates the HBM-roofline CE kernel at scale).
    topk_vals, _ = jax.lax.top_k(loss_padded, k_count)
    return jnp.mean(topk_vals)


def _reference(logits_nchw, target_nhw, k=10):
    # Pure-JAX reference of the PyTorch forward, for sanity checking.
    N, C, H, W = logits_nchw.shape
    x = jnp.transpose(logits_nchw, (0, 2, 3, 1)).reshape(-1, C)
    t = target_nhw.reshape(-1).astype(jnp.int32)
    logp = jax.nn.log_softmax(x, axis=1)
    loss = -jnp.take_along_axis(logp, t[:, None], axis=1)[:, 0]
    k_count = max(1, int(loss.shape[0] * k / 100))
    vals, _ = jax.lax.top_k(loss, k_count)
    return jnp.mean(vals)


if __name__ == "__main__":
    key = jax.random.PRNGKey(0)
    k_logits, k_target = jax.random.split(key)
    N, C, H, W = 2, 4, 16, 16                       # M = 512, top-k count = 51
    logits = jax.random.normal(k_logits, (N, C, H, W), dtype=jnp.float32)
    target = jax.random.randint(k_target, (N, H, W), 0, C, dtype=jnp.int32)

    out = jax.block_until_ready(bce_topk_loss(logits, target, k=10))
    ref = jax.block_until_ready(_reference(logits, target, k=10))
    assert jnp.allclose(out, ref, rtol=1e-5, atol=1e-5), (out, ref)
    print("KERNEL_OK")
</pallas_src>

<mosaic_0001>
module attributes {stable_mosaic.version = 11 : i64} {
  func.func @_ce_loss_kernel(%arg0: i32, %arg1: i32, %arg2: memref<1x4x32x128xf32, #tpu.memory_space<vmem>>, %arg3: memref<1x1x32x128xi8, #tpu.memory_space<vmem>>, %arg4: memref<1x1x32x128xf32, #tpu.memory_space<vmem>>) attributes {dimension_semantics = [#tpu.dimension_semantics<parallel>, #tpu.dimension_semantics<parallel>], iteration_bounds = array<i64: 2, 1>, scalar_prefetch = 0 : i64, scratch_operands = 0 : i64, tpu.core_type = #tpu.core_type<tc>, window_params = [{transform_indices = @transform_0, window_bounds = array<i64: 1, 4, 32, 128>}, {transform_indices = @transform_1, window_bounds = array<i64: 1, 1, 32, 128>}, {transform_indices = @transform_2, window_bounds = array<i64: 1, 1, 32, 128>}]} {
    %c0 = arith.constant 0 : index
    %c0_0 = arith.constant 0 : index
    %c0_1 = arith.constant 0 : index
    %c0_2 = arith.constant 0 : index
    %0 = vector.load %arg3[%c0, %c0_0, %c0_1, %c0_2] : memref<1x1x32x128xi8, #tpu.memory_space<vmem>>, vector<1x1x32x128xi8>
    %1 = arith.extsi %0 : vector<1x1x32x128xi8> to vector<1x1x32x128xi32>
    %c0_3 = arith.constant 0 : index
    %c0_4 = arith.constant 0 : index
    %c0_5 = arith.constant 0 : index
    %c0_6 = arith.constant 0 : index
    %2 = vector.load %arg2[%c0_3, %c0_4, %c0_5, %c0_6] : memref<1x4x32x128xf32, #tpu.memory_space<vmem>>, vector<1x1x32x128xf32>
    %c0_7 = arith.constant 0 : index
    %c1 = arith.constant 1 : index
    %c0_8 = arith.constant 0 : index
    %c0_9 = arith.constant 0 : index
    %3 = vector.load %arg2[%c0_7, %c1, %c0_8, %c0_9] : memref<1x4x32x128xf32, #tpu.memory_space<vmem>>, vector<1x1x32x128xf32>
    %4 = arith.maximumf %2, %3 : vector<1x1x32x128xf32>
    %c0_10 = arith.constant 0 : index
    %c2 = arith.constant 2 : index
    %c0_11 = arith.constant 0 : index
    %c0_12 = arith.constant 0 : index
    %5 = vector.load %arg2[%c0_10, %c2, %c0_11, %c0_12] : memref<1x4x32x128xf32, #tpu.memory_space<vmem>>, vector<1x1x32x128xf32>
    %6 = arith.maximumf %4, %5 : vector<1x1x32x128xf32>
    %c0_13 = arith.constant 0 : index
    %c3 = arith.constant 3 : index
    %c0_14 = arith.constant 0 : index
    %c0_15 = arith.constant 0 : index
    %7 = vector.load %arg2[%c0_13, %c3, %c0_14, %c0_15] : memref<1x4x32x128xf32, #tpu.memory_space<vmem>>, vector<1x1x32x128xf32>
    %8 = arith.maximumf %6, %7 : vector<1x1x32x128xf32>
    %cst = arith.constant 0.000000e+00 : f32
    %9 = vector.broadcast %cst : f32 to vector<1x1x32x128xf32>
    %cst_16 = arith.constant 0.000000e+00 : f32
    %10 = vector.broadcast %cst_16 : f32 to vector<1x1x32x128xf32>
    %c0_17 = arith.constant 0 : index
    %c0_18 = arith.constant 0 : index
    %c0_19 = arith.constant 0 : index
    %c0_20 = arith.constant 0 : index
    %11 = vector.load %arg2[%c0_17, %c0_18, %c0_19, %c0_20] : memref<1x4x32x128xf32, #tpu.memory_space<vmem>>, vector<1x1x32x128xf32>
    %12 = arith.subf %11, %8 : vector<1x1x32x128xf32>
    %13 = math.exp %12 : vector<1x1x32x128xf32>
    %14 = arith.addf %9, %13 : vector<1x1x32x128xf32>
    %c0_i32 = arith.constant 0 : i32
    %15 = vector.broadcast %c0_i32 : i32 to vector<1x1x32x128xi32>
    %16 = arith.cmpi eq, %1, %15 : vector<1x1x32x128xi32>
    %17 = arith.select %16, %12, %10 : vector<1x1x32x128xi1>, vector<1x1x32x128xf32>
    %c0_21 = arith.constant 0 : index
    %c1_22 = arith.constant 1 : index
    %c0_23 = arith.constant 0 : index
    %c0_24 = arith.constant 0 : index
    %18 = vector.load %arg2[%c0_21, %c1_22, %c0_23, %c0_24] : memref<1x4x32x128xf32, #tpu.memory_space<vmem>>, vector<1x1x32x128xf32>
    %19 = arith.subf %18, %8 : vector<1x1x32x128xf32>
    %20 = math.exp %19 : vector<1x1x32x128xf32>
    %21 = arith.addf %14, %20 : vector<1x1x32x128xf32>
    %c1_i32 = arith.constant 1 : i32
    %22 = vector.broadcast %c1_i32 : i32 to vector<1x1x32x128xi32>
    %23 = arith.cmpi eq, %1, %22 : vector<1x1x32x128xi32>
    %24 = arith.select %23, %19, %17 : vector<1x1x32x128xi1>, vector<1x1x32x128xf32>
    %c0_25 = arith.constant 0 : index
    %c2_26 = arith.constant 2 : index
    %c0_27 = arith.constant 0 : index
    %c0_28 = arith.constant 0 : index
    %25 = vector.load %arg2[%c0_25, %c2_26, %c0_27, %c0_28] : memref<1x4x32x128xf32, #tpu.memory_space<vmem>>, vector<1x1x32x128xf32>
    %26 = arith.subf %25, %8 : vector<1x1x32x128xf32>
    %27 = math.exp %26 : vector<1x1x32x128xf32>
    %28 = arith.addf %21, %27 : vector<1x1x32x128xf32>
    %c2_i32 = arith.constant 2 : i32
    %29 = vector.broadcast %c2_i32 : i32 to vector<1x1x32x128xi32>
    %30 = arith.cmpi eq, %1, %29 : vector<1x1x32x128xi32>
    %31 = arith.select %30, %26, %24 : vector<1x1x32x128xi1>, vector<1x1x32x128xf32>
    %c0_29 = arith.constant 0 : index
    %c3_30 = arith.constant 3 : index
    %c0_31 = arith.constant 0 : index
    %c0_32 = arith.constant 0 : index
    %32 = vector.load %arg2[%c0_29, %c3_30, %c0_31, %c0_32] : memref<1x4x32x128xf32, #tpu.memory_space<vmem>>, vector<1x1x32x128xf32>
    %33 = arith.subf %32, %8 : vector<1x1x32x128xf32>
    %34 = math.exp %33 : vector<1x1x32x128xf32>
    %35 = arith.addf %28, %34 : vector<1x1x32x128xf32>
    %c3_i32 = arith.constant 3 : i32
    %36 = vector.broadcast %c3_i32 : i32 to vector<1x1x32x128xi32>
    %37 = arith.cmpi eq, %1, %36 : vector<1x1x32x128xi32>
    %38 = arith.select %37, %33, %31 : vector<1x1x32x128xi1>, vector<1x1x32x128xf32>
    %39 = math.log %35 : vector<1x1x32x128xf32>
    %40 = arith.subf %39, %38 : vector<1x1x32x128xf32>
    %41 = tpu.iota {dimensions = array<i32: 2>} : vector<1x1x32x128xi32>
    %42 = tpu.iota {dimensions = array<i32: 3>} : vector<1x1x32x128xi32>
    %c32_i32 = arith.constant 32 : i32
    %43 = arith.muli %arg1, %c32_i32 : i32
    %44 = vector.broadcast %43 : i32 to vector<1x1x32x128xi32>
    %45 = arith.addi %44, %41 : vector<1x1x32x128xi32>
    %c128_i32 = arith.constant 128 : i32
    %46 = vector.broadcast %c128_i32 : i32 to vector<1x1x32x128xi32>
    %47 = arith.muli %45, %46 : vector<1x1x32x128xi32>
    %48 = arith.addi %47, %42 : vector<1x1x32x128xi32>
    %c256_i32 = arith.constant 256 : i32
    %49 = vector.broadcast %c256_i32 : i32 to vector<1x1x32x128xi32>
    %50 = arith.cmpi slt, %48, %49 : vector<1x1x32x128xi32>
    %cst_33 = arith.constant -3.000000e+38 : f32
    %51 = vector.broadcast %cst_33 : f32 to vector<1x1x32x128xf32>
    %52 = arith.select %50, %40, %51 : vector<1x1x32x128xi1>, vector<1x1x32x128xf32>
    %c0_34 = arith.constant 0 : index
    %c0_35 = arith.constant 0 : index
    %c0_36 = arith.constant 0 : index
    %c0_37 = arith.constant 0 : index
    %53 = vector.load %arg4[%c0_34, %c0_35, %c0_36, %c0_37] : memref<1x1x32x128xf32, #tpu.memory_space<vmem>>, vector<1x1x32x128xf32>
    tpu.vector_store %arg4[%c0_34, %c0_35, %c0_36, %c0_37], %52 {strides = array<i32>} : memref<1x1x32x128xf32, #tpu.memory_space<vmem>>, vector<1x1x32x128xf32>,
    return
  }
  func.func @transform_0(%arg0: i32, %arg1: i32) -> (i32, i32, i32, i32) {
    %c0_i32 = arith.constant 0 : i32
    %c0_i32_0 = arith.constant 0 : i32
    %c0_i32_1 = arith.constant 0 : i32
    return %arg0, %c0_i32, %arg1, %c0_i32_0 : i32, i32, i32, i32
  }
  func.func @transform_1(%arg0: i32, %arg1: i32) -> (i32, i32, i32, i32) {
    %c0_i32 = arith.constant 0 : i32
    %c0_i32_0 = arith.constant 0 : i32
    %c0_i32_1 = arith.constant 0 : i32
    return %arg0, %c0_i32, %arg1, %c0_i32_0 : i32, i32, i32, i32
  }
  func.func @transform_2(%arg0: i32, %arg1: i32) -> (i32, i32, i32, i32) {
    %c0_i32 = arith.constant 0 : i32
    %c0_i32_0 = arith.constant 0 : i32
    %c0_i32_1 = arith.constant 0 : i32
    return %arg0, %c0_i32, %arg1, %c0_i32_0 : i32, i32, i32, i32
  }
}

</mosaic_0001>

<llo_original>
// kernel: tpu_custom_call.1
$region0: #{tpu_custom_call.1}
  #allocation0 [shape = 'u32[]', space=smem, size = 0x4, offset = 0x4, fixed_abs, tag = 'smem constant byte address 0x4 - core index']
  #allocation1 [shape = 'u32[144,128]{1,0:T(1,128)}', space=vmem, size = 0x12000, scoped, tag = 'internal scratch']
  %s0 = inlined_call_operand.hbm [shape: f32[2,4,32,128], index: 0, kind: input, shape index: {}]
  %s1 = inlined_call_operand.hbm [shape: s8[2,1,32,128], index: 1, kind: input, shape index: {}]
  %s2 = inlined_call_operand.hbm [shape: f32[2,1,32,128], index: 2, kind: output, shape index: {}]
  %s3 = sld [smem:[#allocation0]]
  $region49: #{tpu_custom_call.1} parent=0
    _
  %s5 = ssub.s32 1, %s3
  %s6 = scalar_select 0, %s5, %s3
  $region1: #{tpu_custom_call.1} parent=0
    #allocation2 [shape = 'u8[131072]{0}', space=vmem, size = 0x20000, scoped, tag = 'input window, operand 0']
    #allocation3 [shape = 's32[2]{0}', space=sflag, size = 0x8, scoped, tag = 'scoped memory for tpu_custom_call.1']
    #allocation4 [shape = 's32[2]{0}', space=sflag, size = 0x8, scoped, tag = 'scoped memory for tpu_custom_call.1']
    #allocation5 [shape = 'u8[8192]{0}', space=vmem, size = 0x2000, scoped, tag = 'input window, operand 1']
    #allocation6 [shape = 's32[2]{0}', space=sflag, size = 0x8, scoped, tag = 'scoped memory for tpu_custom_call.1']
    #allocation7 [shape = 'u8[32768]{0}', space=vmem, size = 0x8000, scoped, tag = 'output window, operand 0']
    %7 = vsyncpa [#allocation3], 0
    %s8 = scalar_lea.sflag [#allocation3], 1
    %9 = vsyncpa %s8, 0
    %10 = vsyncpa [#allocation6], 0
    %s11 = scalar_lea.sflag [#allocation6], 1
    %12 = vsyncpa %s11, 0
    %13 = vsyncpa [#allocation4], 0
    %s14 = scalar_lea.sflag [#allocation4], 1
    %15 = vsyncpa %s14, 0
    loop: start=0, step=1, limit=4
    $region2: #{tpu_custom_call.1} parent=1 // loop_pre_header
      _
    $region3: #{tpu_custom_call.1} parent=1 // loop_header
      %s17 = sphi 0, %s21
      %p18 = scmp.ge.s32.totalorder %s17, 4
      %s24 = sphi 0, %s36
      %s25 = sphi 0, %s32
      %s26 = sphi 0, %s24
      %s27 = sphi 0, %s25
      %s28 = sphi 0, %s26
      %s29 = sphi 0, %s27
      %s41 = sphi 0, %s43
      %s44 = sphi 0, %s41
      %s45 = sphi 0, %s44
      %s61 = sphi 0, %s45
      %s69 = sphi 0, %s71
      %s72 = sphi 0, %s69
      %s73 = sphi 0, %s72
      %s89 = sphi 0, %s73
      %s97 = sphi 0, %s99
      %s100 = sphi 0, %s97
      %s101 = sphi 0, %s100
      %s117 = sphi 0, %s101
    $region4: #{tpu_custom_call.1} parent=1 // loop_header_branch
      %20 = sbr.rel (%p18) target = $region8
    $region5: #{tpu_custom_call.1} parent=1 // loop_body
      %s22 = ssub.s32 %s17, 1
      %s23 = ssub.s32 %s17, 2
      %s30 = sadd.s32 1, %s25
      %p31 = scmp.ge.s32.totalorder %s30, 1
      %s32 = scalar_select %p31, 0, %s30
      %s33 = sadd.s32 1, %s24
      %s34 = scalar_select %p31, %s33, %s24
      %p35 = scmp.ge.s32.totalorder %s34, 2
      %s36 = scalar_select %p35, 0, %s34
      %s37 = ssub.s32 %s24, %s36
      %s38 = ssub.s32 %s25, %s32
      %s39 = sor.u32 %s37, %s38
      %p40 = scmp.eq.s32.totalorder %s39, 0
      %s42 = sadd.s32 %s41, 1
      %s43 = scalar_select %p40, %s41, %s42
      %p46 = pneg %p40
      %p47 = scmp.eq.s32.totalorder %s17, 1
      %p48 = por %p46, %p47
      %p49 = scmp.ne.s32.totalorder %s41, %s44
      %p50 = scmp.eq.s32.totalorder %s17, 0
      %p51 = por %p49, %p50
      %p52 = scmp.ne.s32.totalorder %s41, %s44
      %p53 = scmp.eq.s32.totalorder %s22, 1
      %p54 = por %p52, %p53
      %p55 = scmp.ne.s32.totalorder %s44, %s45
      %p56 = scmp.eq.s32.totalorder %s22, 0
      %p57 = por %p55, %p56
      %p58 = scmp.ne.s32.totalorder %s44, %s45
      %p59 = scmp.eq.s32.totalorder %s23, 1
      %p60 = por %p58, %p59
      %p62 = scmp.ne.s32.totalorder %s45, %s61
      %p63 = scmp.eq.s32.totalorder %s23, 0
      %p64 = por %p62, %p63
      %s65 = ssub.s32 %s24, %s36
      %s66 = ssub.s32 %s25, %s32
      %s67 = sor.u32 %s65, %s66
      %p68 = scmp.eq.s32.totalorder %s67, 0
      %s70 = sadd.s32 %s69, 1
      %s71 = scalar_select %p68, %s69, %s70
      %p74 = pneg %p68
      %p75 = scmp.eq.s32.totalorder %s17, 1
      %p76 = por %p74, %p75
      %p77 = scmp.ne.s32.totalorder %s69, %s72
      %p78 = scmp.eq.s32.totalorder %s17, 0
      %p79 = por %p77, %p78
      %p80 = scmp.ne.s32.totalorder %s69, %s72
      %p81 = scmp.eq.s32.totalorder %s22, 1
      %p82 = por %p80, %p81
      %p83 = scmp.ne.s32.totalorder %s72, %s73
      %p84 = scmp.eq.s32.totalorder %s22, 0
      %p85 = por %p83, %p84
      %p86 = scmp.ne.s32.totalorder %s72, %s73
      %p87 = scmp.eq.s32.totalorder %s23, 1
      %p88 = por %p86, %p87
      %p90 = scmp.ne.s32.totalorder %s73, %s89
      %p91 = scmp.eq.s32.totalorder %s23, 0
      %p92 = por %p90, %p91
      %s93 = ssub.s32 %s24, %s36
      %s94 = ssub.s32 %s25, %s32
      %s95 = sor.u32 %s93, %s94
      %p96 = scmp.eq.s32.totalorder %s95, 0
      %s98 = sadd.s32 %s97, 1
      %s99 = scalar_select %p96, %s97, %s98
      %p102 = pneg %p96
      %p103 = scmp.eq.s32.totalorder %s17, 1
      %p104 = por %p102, %p103
      %p105 = scmp.ne.s32.totalorder %s97, %s100
      %p106 = scmp.eq.s32.totalorder %s17, 0
      %p107 = por %p105, %p106
      %p108 = scmp.ne.s32.totalorder %s97, %s100
      %p109 = scmp.eq.s32.totalorder %s22, 1
      %p110 = por %p108, %p109
      %p111 = scmp.ne.s32.totalorder %s100, %s101
      %p112 = scmp.eq.s32.totalorder %s22, 0
      %p113 = por %p111, %p112
      %p114 = scmp.ne.s32.totalorder %s100, %s101
      %p115 = scmp.eq.s32.totalorder %s23, 1
      %p116 = por %p114, %p115
      %p118 = scmp.ne.s32.totalorder %s101, %s117
      %p119 = scmp.eq.s32.totalorder %s23, 0
      %p120 = por %p118, %p119
      %p121 = scmp.le.s32.totalorder 1, %s17
      %p122 = scmp.lt.s32.totalorder %s17, 3
      %p123 = pnand %p121, %p122
      %p124 = pneg %p123
      // Predicated region
      $region9: #{tpu_custom_call.1} parent=5 // pred_check
        _
      $region10: #{tpu_custom_call.1} parent=5 // pred_check_branch
        %126 = sbr.rel (%p123) target = $region12
      $region11: #{tpu_custom_call.1} parent=5 // pred_region
        %s127 = ssub.s32 %s17, 1
      $region12: #{tpu_custom_call.1} parent=5 // pred_fallthru
        _
      %p128 = scmp.lt.s32.totalorder %s17, 2
      // Predicated region
      $region13: #{tpu_custom_call.1} parent=5 // pred_check
        %p129 = pneg %p128
      $region14: #{tpu_custom_call.1} parent=5 // pred_check_branch
        %131 = sbr.rel (%p129) target = $region16
      $region15: #{tpu_custom_call.1} parent=5 // pred_region
        // Predicated region
        $region17: #{tpu_custom_call.1} parent=15 // pred_check
          %p132 = pneg %p51
        $region18: #{tpu_custom_call.1} parent=15 // pred_check_branch
          %134 = sbr.rel (%p132) target = $region20
        $region19: #{tpu_custom_call.1} parent=15 // pred_region
          %s135 = sand.u32 %s41, 1
          %s136 = scalar_lea.sflag [#allocation3], %s135
          %s137 = sand.u32 %s41, 1
          %s138 = smul.addr %s137, 128
          %s139 = scalar_lea.vmem [#allocation2], %s138
          %s140 = smul.u32 4, %s25
          %s142 = ssub.s32 2048, 2048
          %143 = vsyncadd %s136, %s142
          %s144 = smul.addr %s24, 16
          %s145 = sadd.s32 %s140, %s144
          %s146 = smul.addr %s145, 128
          %s147 = scalar_lea.hbm %s0, %s146
          %s148 = sshll.u32 %s139, 4
          %s149 = int_to_ptr.vmem [resolvable:$true] %s148
          %154 = dma.hbm_to_vmem [thread:$0]  %s147, 2048, %s149, %s136, 128, 128, 8
        $region20: #{tpu_custom_call.1} parent=15 // pred_fallthru
          _
        // Predicated region
        $region21: #{tpu_custom_call.1} parent=15 // pred_check
          %p155 = pneg %p79
        $region22: #{tpu_custom_call.1} parent=15 // pred_check_branch
          %157 = sbr.rel (%p155) target = $region24
        $region23: #{tpu_custom_call.1} parent=15 // pred_region
          %s158 = sand.u32 %s69, 1
          %s159 = scalar_lea.sflag [#allocation6], %s158
          %s160 = sand.u32 %s69, 1
          %s161 = smul.addr %s160, 8
          %s162 = scalar_lea.vmem [#allocation5], %s161
          %s164 = ssub.s32 128, 128
          %165 = vsyncadd %s159, %s164
          %s166 = sadd.s32 %s25, %s24
          %s167 = smul.addr %s166, 128
          %s168 = scalar_lea.hbm %s1, %s167
          %s170 = sshll.u32 %s162, 4
          %s171 = int_to_ptr.vmem [resolvable:$true] %s170
          %173 = dma.hbm_to_vmem [thread:$0]  %s168, 128, %s171, %s159
        $region24: #{tpu_custom_call.1} parent=15 // pred_fallthru
          _
      $region16: #{tpu_custom_call.1} parent=5 // pred_fallthru
        _
      %p174 = scmp.le.s32.totalorder 1, %s17
      %p175 = scmp.lt.s32.totalorder %s17, 3
      %p176 = pnand %p174, %p175
      %p177 = pneg %p176
      // Predicated region
      $region25: #{tpu_custom_call.1} parent=5 // pred_check
        _
      $region26: #{tpu_custom_call.1} parent=5 // pred_check_branch
        %179 = sbr.rel (%p176) target = $region28
      $region27: #{tpu_custom_call.1} parent=5 // pred_region
        %s180 = ssub.s32 %s17, 1
        %s181 = sand.u32 %s44, 1
        %s182 = scalar_lea.sflag [#allocation3], %s181
        %s183 = sand.u32 %s44, 1
        %s184 = smul.addr %s183, 128
        %s185 = scalar_lea.vmem [#allocation2], %s184
        // Predicated region
        $region29: #{tpu_custom_call.1} parent=27 // pred_check
          %p186 = pneg %p57
        $region30: #{tpu_custom_call.1} parent=27 // pred_check_branch
          %188 = sbr.rel (%p186) target = $region32
        $region31: #{tpu_custom_call.1} parent=27 // pred_region
          %189 = dma.done %s182, 2048
        $region32: #{tpu_custom_call.1} parent=27 // pred_fallthru
          _
        %s190 = sand.u32 %s72, 1
        %s191 = scalar_lea.sflag [#allocation6], %s190
        %s192 = sand.u32 %s72, 1
        %s193 = smul.addr %s192, 8
        %s194 = scalar_lea.vmem [#allocation5], %s193
        // Predicated region
        $region33: #{tpu_custom_call.1} parent=27 // pred_check
          %p195 = pneg %p85
        $region34: #{tpu_custom_call.1} parent=27 // pred_check_branch
          %197 = sbr.rel (%p195) target = $region36
        $region35: #{tpu_custom_call.1} parent=27 // pred_region
          %198 = dma.done %s191, 128
        $region36: #{tpu_custom_call.1} parent=27 // pred_fallthru
          _
        %s199 = sand.u32 %s44, 1
        %s200 = scalar_lea.sflag [#allocation3], %s199
        %s201 = sand.u32 %s44, 1
        %s202 = smul.addr %s201, 128
        %s203 = scalar_lea.vmem [#allocation2], %s202
        %p204 = pneg %p57
        %p205 = pneg %p54
        %s206 = sand.u32 %s72, 1
        %s207 = scalar_lea.sflag [#allocation6], %s206
        %s208 = sand.u32 %s72, 1
        %s209 = smul.addr %s208, 8
        %s210 = scalar_lea.vmem [#allocation5], %s209
        %p211 = pneg %p85
        %p212 = pneg %p82
        %p213 = pneg %p113
        %p214 = pneg %p110
        %s215 = sand.u32 %s100, 1
        %s216 = scalar_lea.sflag [#allocation4], %s215
        %s217 = sand.u32 %s100, 1
        %s218 = smul.addr %s217, 32
        %s219 = scalar_lea.vmem [#allocation7], %s218
        %s220 = smul.u32 4, %s27
        %s221 = smul.u32 4, %s27
        %v222 = vld [vmem:[%s194] sm:$0xff]
        %v223 = vunpack.c.0.s8 %v222
        %v224 = vunpack.c.1.s8 %v222
        %v225 = vunpack.c.2.s8 %v222
        %v226 = vunpack.c.3.s8 %v222
        %v227 = vld [vmem:[%s185] sm:$0xff]
        %v228 = vld [vmem:[%s185 + $0x8] sm:$0xff]
        %v229 = vld [vmem:[%s185 + $0x10] sm:$0xff]
        %v230 = vld [vmem:[%s185 + $0x18] sm:$0xff]
        %s231 = scalar_lea.vmem %s185, 32 [#allocation2]
        %v232 = vld [vmem:[%s231] sm:$0xff]
        %v233 = vld [vmem:[%s231 + $0x8] sm:$0xff]
        %v234 = vld [vmem:[%s231 + $0x10] sm:$0xff]
        %v235 = vld [vmem:[%s231 + $0x18] sm:$0xff]
        %v236 = vmax.f32 %v227, %v232
        %v237 = vmax.f32 %v228, %v233
        %v238 = vmax.f32 %v229, %v234
        %v239 = vmax.f32 %v230, %v235
        %s240 = scalar_lea.vmem %s185, 64 [#allocation2]
        %v241 = vld [vmem:[%s240] sm:$0xff]
        %v242 = vld [vmem:[%s240 + $0x8] sm:$0xff]
        %v243 = vld [vmem:[%s240 + $0x10] sm:$0xff]
        %v244 = vld [vmem:[%s240 + $0x18] sm:$0xff]
        %v245 = vmax.f32 %v236, %v241
        %v246 = vmax.f32 %v237, %v242
        %v247 = vmax.f32 %v238, %v243
        %v248 = vmax.f32 %v239, %v244
        %s249 = scalar_lea.vmem %s185, 96 [#allocation2]
        %v250 = vld [vmem:[%s249] sm:$0xff]
        %v251 = vld [vmem:[%s249 + $0x8] sm:$0xff]
        %v252 = vld [vmem:[%s249 + $0x10] sm:$0xff]
        %v253 = vld [vmem:[%s249 + $0x18] sm:$0xff]
        %v254 = vmax.f32 %v245, %v250
        %v255 = vmax.f32 %v246, %v251
        %v256 = vmax.f32 %v247, %v252
        %v257 = vmax.f32 %v248, %v253
        %v258 = vsub.f32 %v227, %v254
        %v259 = vsub.f32 %v228, %v255
        %v260 = vsub.f32 %v229, %v256
        %v261 = vsub.f32 %v230, %v257
        %v262 = vmul.f32 %v258, 1.442695
        %v263 = vpow.pop %v262
        %v264 = vmul.f32 %v259, 1.442695
        %v265 = vpow.pop %v264
        %v266 = vmul.f32 %v260, 1.442695
        %v267 = vpow.pop %v266
        %v268 = vmul.f32 %v261, 1.442695
        %v269 = vpow.pop %v268
        %v270 = vadd.f32 %v263, 0.0
        %v271 = vadd.f32 %v265, 0.0
        %v272 = vadd.f32 %v267, 0.0
        %v273 = vadd.f32 %v269, 0.0
        %vm274 = vcmp.eq.s32.totalorder %v223, 0
        %vm275 = vcmp.eq.s32.totalorder %v224, 0
        %vm276 = vcmp.eq.s32.totalorder %v225, 0
        %vm277 = vcmp.eq.s32.totalorder %v226, 0
        %v278 = vsel %vm274, %v258, 0.0
        %v279 = vsel %vm275, %v259, 0.0
        %v280 = vsel %vm276, %v260, 0.0
        %v281 = vsel %vm277, %v261, 0.0
        %v282 = vsub.f32 %v232, %v254
        %v283 = vsub.f32 %v233, %v255
        %v284 = vsub.f32 %v234, %v256
        %v285 = vsub.f32 %v235, %v257
        %v286 = vmul.f32 %v282, 1.442695
        %v287 = vpow.pop %v286
        %v288 = vmul.f32 %v283, 1.442695
        %v289 = vpow.pop %v288
        %v290 = vmul.f32 %v284, 1.442695
        %v291 = vpow.pop %v290
        %v292 = vmul.f32 %v285, 1.442695
        %v293 = vpow.pop %v292
        %v294 = vadd.f32 %v270, %v287
        %v295 = vadd.f32 %v271, %v289
        %v296 = vadd.f32 %v272, %v291
        %v297 = vadd.f32 %v273, %v293
        %vm298 = vcmp.eq.s32.totalorder %v223, 1
        %vm299 = vcmp.eq.s32.totalorder %v224, 1
        %vm300 = vcmp.eq.s32.totalorder %v225, 1
        %vm301 = vcmp.eq.s32.totalorder %v226, 1
        %v302 = vsel %vm298, %v282, %v278
        %v303 = vsel %vm299, %v283, %v279
        %v304 = vsel %vm300, %v284, %v280
        %v305 = vsel %vm301, %v285, %v281
        %v306 = vsub.f32 %v241, %v254
        %v307 = vsub.f32 %v242, %v255
        %v308 = vsub.f32 %v243, %v256
        %v309 = vsub.f32 %v244, %v257
        %v310 = vmul.f32 %v306, 1.442695
        %v311 = vpow.pop %v310
        %v312 = vmul.f32 %v307, 1.442695
        %v313 = vpow.pop %v312
        %v314 = vmul.f32 %v308, 1.442695
        %v315 = vpow.pop %v314
        %v316 = vmul.f32 %v309, 1.442695
        %v317 = vpow.pop %v316
        %v318 = vadd.f32 %v294, %v311
        %v319 = vadd.f32 %v295, %v313
        %v320 = vadd.f32 %v296, %v315
        %v321 = vadd.f32 %v297, %v317
        %vm322 = vcmp.eq.s32.totalorder %v223, 2
        %vm323 = vcmp.eq.s32.totalorder %v224, 2
        %vm324 = vcmp.eq.s32.totalorder %v225, 2
        %vm325 = vcmp.eq.s32.totalorder %v226, 2
        %v326 = vsel %vm322, %v306, %v302
        %v327 = vsel %vm323, %v307, %v303
        %v328 = vsel %vm324, %v308, %v304
        %v329 = vsel %vm325, %v309, %v305
        %v330 = vsub.f32 %v250, %v254
        %v331 = vsub.f32 %v251, %v255
        %v332 = vsub.f32 %v252, %v256
        %v333 = vsub.f32 %v253, %v257
        %v334 = vmul.f32 %v330, 1.442695
        %v335 = vpow.pop %v334
        %v336 = vmul.f32 %v331, 1.442695
        %v337 = vpow.pop %v336
        %v338 = vmul.f32 %v332, 1.442695
        %v339 = vpow.pop %v338
        %v340 = vmul.f32 %v333, 1.442695
        %v341 = vpow.pop %v340
        %v342 = vadd.f32 %v318, %v335
        %v343 = vadd.f32 %v319, %v337
        %v344 = vadd.f32 %v320, %v339
        %v345 = vadd.f32 %v321, %v341
        %vm346 = vcmp.eq.s32.totalorder %v223, 3
        %vm347 = vcmp.eq.s32.totalorder %v224, 3
        %vm348 = vcmp.eq.s32.totalorder %v225, 3
        %vm349 = vcmp.eq.s32.totalorder %v226, 3
        %v350 = vsel %vm346, %v330, %v326
        %v351 = vsel %vm347, %v331, %v327
        %v352 = vsel %vm348, %v332, %v328
        %v353 = vsel %vm349, %v333, %v329
        %v354 = vlog2.pop %v342
        %v355 = vmul.f32 %v354, 0.6931472
        %v356 = vlog2.pop %v343
        %v357 = vmul.f32 %v356, 0.6931472
        %v358 = vlog2.pop %v344
        %v359 = vmul.f32 %v358, 0.6931472
        %v360 = vlog2.pop %v345
        %v361 = vmul.f32 %v360, 0.6931472
        %v362 = vsub.f32 %v355, %v350
        %v363 = vsub.f32 %v357, %v351
        %v364 = vsub.f32 %v359, %v352
        %v365 = vsub.f32 %v361, %v353
        %v366 = vlaneseq
        %v367 = vshrl.u32 %v366, 7
        %v368 = vadd.s32 %v367, 8
        %v369 = vadd.s32 %v367, 16
        %v370 = vadd.s32 %v367, 24
        %v371 = vlaneseq
        %v372 = vand.u32 %v371, 127
        %s373 = smul.u32 %s27, 32
        %v374 = vstv %s373
        %v375 = vadd.s32 %v374, %v367
        %v376 = vadd.s32 %v374, %v368
        %v377 = vadd.s32 %v374, %v369
        %v378 = vadd.s32 %v374, %v370
        %v379 = vmul.u32 %v375, 128
        %v380 = vmul.u32 %v376, 128
        %v381 = vmul.u32 %v377, 128
        %v382 = vmul.u32 %v378, 128
        %v383 = vadd.s32 %v379, %v372
        %v384 = vadd.s32 %v380, %v372
        %v385 = vadd.s32 %v381, %v372
        %v386 = vadd.s32 %v382, %v372
        %vm387 = vcmp.lt.s32.totalorder %v383, 256
        %vm388 = vcmp.lt.s32.totalorder %v384, 256
        %vm389 = vcmp.lt.s32.totalorder %v385, 256
        %vm390 = vcmp.lt.s32.totalorder %v386, 256
        %v391 = vsel %vm387, %v362, -3e+38
        %v392 = vsel %vm388, %v363, -3e+38
        %v393 = vsel %vm389, %v364, -3e+38
        %v394 = vsel %vm390, %v365, -3e+38
        %395 = vst [vmem:[%s219] sm:$0xff] %v391
        %396 = vst [vmem:[%s219 + $0x8] sm:$0xff] %v392
        %397 = vst [vmem:[%s219 + $0x10] sm:$0xff] %v393
        %398 = vst [vmem:[%s219 + $0x18] sm:$0xff] %v394
        %s399 = sand.u32 %s100, 1
        %s400 = scalar_lea.sflag [#allocation4], %s399
        %s401 = sand.u32 %s100, 1
        %s402 = smul.addr %s401, 32
        %s403 = scalar_lea.vmem [#allocation7], %s402
        // Predicated region
        $region37: #{tpu_custom_call.1} parent=27 // pred_check
          %p404 = pneg %p110
        $region38: #{tpu_custom_call.1} parent=27 // pred_check_branch
          %406 = sbr.rel (%p404) target = $region40
        $region39: #{tpu_custom_call.1} parent=27 // pred_region
          %s407 = smul.u32 4, %s27
          %s409 = ssub.s32 512, 512
          %410 = vsyncadd %s400, %s409
          %s411 = smul.addr %s26, 4
          %s412 = sadd.s32 %s407, %s411
          %s413 = smul.addr %s412, 128
          %s414 = scalar_lea.hbm %s2, %s413
          %s415 = sshll.u32 %s403, 4
          %s416 = int_to_ptr.vmem [resolvable:$true] %s415
          %421 = dma.vmem_to_hbm [thread:$0]  %s416, 512, %s414, %s400, 128, 128, 8
        $region40: #{tpu_custom_call.1} parent=27 // pred_fallthru
          _
      $region28: #{tpu_custom_call.1} parent=5 // pred_fallthru
        _
      %p422 = scmp.le.s32.totalorder 2, %s17
      // Predicated region
      $region41: #{tpu_custom_call.1} parent=5 // pred_check
        %p423 = pneg %p422
      $region42: #{tpu_custom_call.1} parent=5 // pred_check_branch
        %425 = sbr.rel (%p423) target = $region44
      $region43: #{tpu_custom_call.1} parent=5 // pred_region
        %s426 = ssub.s32 %s17, 2
        // Predicated region
        $region45: #{tpu_custom_call.1} parent=43 // pred_check
          %p427 = pneg %p116
        $region46: #{tpu_custom_call.1} parent=43 // pred_check_branch
          %429 = sbr.rel (%p427) target = $region48
        $region47: #{tpu_custom_call.1} parent=43 // pred_region
          %s430 = sand.u32 %s101, 1
          %s431 = scalar_lea.sflag [#allocation4], %s430
          %s432 = sand.u32 %s101, 1
          %s433 = smul.addr %s432, 32
          %s434 = scalar_lea.vmem [#allocation7], %s433
          %435 = dma.done %s431, 512
        $region48: #{tpu_custom_call.1} parent=43 // pred_fallthru
          _
      $region44: #{tpu_custom_call.1} parent=5 // pred_fallthru
        _
    $region6: #{tpu_custom_call.1} parent=1 // loop_footer
      %s21 = sadd.s32 1, %s17
    $region7: #{tpu_custom_call.1} parent=1 // loop_footer_branch
      %16 = sbr.rel target = $region3
    $region8: #{tpu_custom_call.1} parent=1 // loop_exit
      _
    %436 = vsyncpa [#allocation3], 1
    %s437 = scalar_lea.sflag [#allocation3], 1
    %438 = vsyncpa %s437, 1
    %439 = vsyncpa [#allocation6], 1
    %s440 = scalar_lea.sflag [#allocation6], 1
    %441 = vsyncpa %s440, 1
    %442 = vsyncpa [#allocation4], 1
    %s443 = scalar_lea.sflag [#allocation4], 1
    %444 = vsyncpa %s443, 1

</llo_original>
